<compile_context>
chip_gen: v7x
topology: tpu7x:2x2x1
jax: 0.10.0
libtpu: 0.0.40
codegen_flags: <defaults>
</compile_context>

<pallas_src>
import functools

import jax
import jax.numpy as jnp
from jax.experimental import pallas as pl
from jax.experimental.pallas import tpu as pltpu

LN_EPS = 1e-5


def _layer_norm(xb, lnw, lnb):
    # xb: [T, N, c_z]; lnw/lnb: [1, c_z]
    mu = jnp.mean(xb, axis=-1, keepdims=True)
    var = jnp.mean((xb - mu) ** 2, axis=-1, keepdims=True)
    xn = (xb - mu) * jax.lax.rsqrt(var + LN_EPS)
    return xn * lnw[None] + lnb[None]


# --------------------------------------------------------------------------
# Kernel A: LayerNorm (not stored) + triangle bias       grid = (B, N/TILE)
# --------------------------------------------------------------------------
def _ln_bias_kernel(x_ref, lnw_ref, lnb_ref, wlin_ref, tb_ref, *, tile, n, c_z):
    xn = _layer_norm(x_ref[0], lnw_ref[...], lnb_ref[...])        # [T, N, c_z]
    xn2d = xn.reshape(tile * n, c_z)                              # merge rows
    # triangle_bias[h, m] = sum_c W_lin[h, c] * xn2d[m, c]  -> one MXU matmul,
    # result is lane-dense [H, T*N] and stored directly into [B, H, N*N].
    tb_ref[0] = jax.lax.dot_general(
        wlin_ref[...], xn2d, (((1,), (1,)), ((), ())),
        preferred_element_type=jnp.float32)


# --------------------------------------------------------------------------
# Kernel B: gated MHA over TILE rows of the pair rep      grid = (B, N/TILE)
# --------------------------------------------------------------------------
def _attn_kernel(x_ref, mask_ref, tb_ref, lnw_ref, lnb_ref, wqkvg_ref, bg_ref,
                 wo_ref, bo_ref, out_ref, *, no_heads, c_hidden, tile, n, c_z,
                 inf, compute_dtype):
    hc = no_heads * c_hidden

    # LayerNorm recomputed inline (cheap VPU work, saves the xln HBM round trip).
    xn = _layer_norm(x_ref[0], lnw_ref[...], lnb_ref[...])        # [T, N, c_z]
    x2d = xn.reshape(tile * n, c_z).astype(compute_dtype)         # [M, c_z]

    # Fused q/k/v/g projection: one [M, c_z] @ [c_z, 4*H*C] MXU matmul.
    proj = jnp.dot(x2d, wqkvg_ref[...],
                   preferred_element_type=jnp.float32)            # [M, 4*HC]
    q = proj[:, 0 * hc:1 * hc] * (c_hidden ** -0.5)
    k = proj[:, 1 * hc:2 * hc]
    v = proj[:, 2 * hc:3 * hc]
    g = jax.nn.sigmoid(proj[:, 3 * hc:4 * hc] + bg_ref[...])      # [M, HC]

    q3 = q.reshape(tile, n, hc).astype(compute_dtype)             # [T, N, HC]
    k3 = k.reshape(tile, n, hc).astype(compute_dtype)
    v3 = v.reshape(tile, n, hc).astype(compute_dtype)

    mb = (inf * (mask_ref[0] - 1.0))[:, None, :]                  # [T, 1, Nk]
    tb = tb_ref[0]                                                # [H, Nq, Nk]

    # Per-head loop (H is small); each dot_general is batched over the TILE
    # rows, matching the supported 'bqd,bkd->bqk' / 'bqk,bkd->bqd' pattern.
    outs = []
    for h in range(no_heads):
        sl = slice(h * c_hidden, (h + 1) * c_hidden)
        qh, kh, vh = q3[:, :, sl], k3[:, :, sl], v3[:, :, sl]     # [T, N, C]
        logits = jax.lax.dot_general(                             # [T, Nq, Nk]
            qh, kh, (((2,), (2,)), ((0,), (0,))),
            preferred_element_type=jnp.float32)
        logits = logits + mb + tb[h][None]
        m = jnp.max(logits, axis=-1, keepdims=True)
        p = jnp.exp(logits - m)
        a = p * pl.reciprocal(jnp.sum(p, axis=-1, keepdims=True), approx=True)
        outs.append(jax.lax.dot_general(                          # [T, Nq, C]
            a.astype(compute_dtype), vh, (((2,), (1,)), ((0,), (0,))),
            preferred_element_type=jnp.float32))

    o = jnp.concatenate(outs, axis=-1).reshape(tile * n, hc) * g  # gated [M,HC]
    out = jnp.dot(o.astype(compute_dtype), wo_ref[...],
                  preferred_element_type=jnp.float32) + bo_ref[...]
    out_ref[0] = out.reshape(tile, n, c_z)
    # TODO(synk): for c_z < 128 a lane-dense [TILE, N*c_z] store (in-kernel
    # relayout) would replace the masked vst.msk writes; skipped for safety.


# --------------------------------------------------------------------------
# Wrapper
# --------------------------------------------------------------------------
def _choose_tile(n):
    """Smallest multiple-of-8 divisor t of n with (t*n) % 128 == 0 and
    t*n >= 128 (fills MXU M dim, keeps >=2 grid steps/batch for megacore).
    Falls back to t = n (single tile, always BlockSpec-legal)."""
    for t in range(8, n, 8):
        if n % t == 0 and (t * n) % 128 == 0 and t * n >= 128:
            return t
    return n


def triangle_attention(x, mask, params, *, starting=True, inf=1.0e9,
                       compute_dtype=jnp.float32, row_tile=None):
    (lnw, lnb, wlin_t, wq, wk, wv, wg, bg, wo, bo) = params
    if not starting:
        x = jnp.swapaxes(x, -2, -3)
        mask = jnp.swapaxes(mask, -1, -2)

    B, N, _, c_z = x.shape
    H = wlin_t.shape[0]
    HC = wq.shape[1]
    C = HC // H
    T = _choose_tile(N) if row_tile is None else row_tile
    assert N % T == 0, "row tile must divide N"

    x = x.astype(jnp.float32)
    mask = mask.astype(jnp.float32)

    # Fused (q | k | v | g) projection weight; MXU-operand dtype casts.
    wqkvg = jnp.concatenate([wq, wk, wv, wg], axis=1).astype(compute_dtype)
    wo_c = wo.astype(compute_dtype)

    cparams = pltpu.CompilerParams(
        dimension_semantics=("parallel", "parallel"))

    # ---- Kernel A: triangle bias (lane-dense [B, H, N*N]) -----------------
    tb = pl.pallas_call(
        functools.partial(_ln_bias_kernel, tile=T, n=N, c_z=c_z),
        grid=(B, N // T),
        in_specs=[
            pl.BlockSpec((1, T, N, c_z), lambda b, q: (b, q, 0, 0)),
            pl.BlockSpec((1, c_z), lambda b, q: (0, 0)),
            pl.BlockSpec((1, c_z), lambda b, q: (0, 0)),
            pl.BlockSpec((H, c_z), lambda b, q: (0, 0)),
        ],
        out_specs=pl.BlockSpec((1, H, T * N), lambda b, q: (b, 0, q)),
        out_shape=jax.ShapeDtypeStruct((B, H, N * N), jnp.float32),
        compiler_params=cparams,
    )(x, lnw, lnb, wlin_t)
    tb = tb.reshape(B, H, N, N)          # metadata-only reshape

    # ---- Kernel B: gated MHA, TILE rows per grid step ---------------------
    out = pl.pallas_call(
        functools.partial(_attn_kernel, no_heads=H, c_hidden=C, tile=T, n=N,
                          c_z=c_z, inf=float(inf),
                          compute_dtype=compute_dtype),
        grid=(B, N // T),
        in_specs=[
            pl.BlockSpec((1, T, N, c_z), lambda b, i: (b, i, 0, 0)),  # x rows
            pl.BlockSpec((1, T, N), lambda b, i: (b, i, 0)),          # mask rows
            pl.BlockSpec((1, H, N, N), lambda b, i: (b, 0, 0, 0)),    # tri bias
            pl.BlockSpec((1, c_z), lambda b, i: (0, 0)),              # LN weight
            pl.BlockSpec((1, c_z), lambda b, i: (0, 0)),              # LN bias
            pl.BlockSpec((c_z, 4 * HC), lambda b, i: (0, 0)),         # W_qkvg
            pl.BlockSpec((1, HC), lambda b, i: (0, 0)),               # b_g
            pl.BlockSpec((HC, c_z), lambda b, i: (0, 0)),             # W_o
            pl.BlockSpec((1, c_z), lambda b, i: (0, 0)),              # b_o
        ],
        out_specs=pl.BlockSpec((1, T, N, c_z), lambda b, i: (b, i, 0, 0)),
        out_shape=jax.ShapeDtypeStruct((B, N, N, c_z), jnp.float32),
        compiler_params=cparams,
    )(x, mask, tb, lnw, lnb, wqkvg, bg, wo_c, bo)

    if not starting:
        out = jnp.swapaxes(out, -2, -3)
    return out


# --------------------------------------------------------------------------
# Pure-JAX reference (mirrors the PyTorch forward)
# --------------------------------------------------------------------------
def triangle_attention_ref(x, mask, params, *, starting=True, inf=1.0e9):
    (lnw, lnb, wlin_t, wq, wk, wv, wg, bg, wo, bo) = params
    if not starting:
        x = jnp.swapaxes(x, -2, -3)
        mask = jnp.swapaxes(mask, -1, -2)
    B, N, _, c_z = x.shape
    H = wlin_t.shape[0]
    HC = wq.shape[1]
    C = HC // H
    hi = jax.lax.Precision.HIGHEST

    mu = jnp.mean(x, -1, keepdims=True)
    var = jnp.mean((x - mu) ** 2, -1, keepdims=True)
    xn = (x - mu) / jnp.sqrt(var + LN_EPS) * lnw[0] + lnb[0]

    mask_bias = inf * (mask - 1.0)                                   # [B,I,K]
    tb = jnp.einsum('bqkc,hc->bhqk', xn, wlin_t, precision=hi)       # [B,H,N,N]

    q = jnp.einsum('bijc,cd->bijd', xn, wq, precision=hi) * (C ** -0.5)
    k = jnp.einsum('bijc,cd->bijd', xn, wk, precision=hi)
    v = jnp.einsum('bijc,cd->bijd', xn, wv, precision=hi)
    qh = q.reshape(B, N, N, H, C)
    kh = k.reshape(B, N, N, H, C)
    vh = v.reshape(B, N, N, H, C)

    logits = jnp.einsum('biqhc,bikhc->bihqk', qh, kh, precision=hi)
    logits = logits + mask_bias[:, :, None, None, :] + tb[:, None]
    a = jax.nn.softmax(logits, axis=-1)
    o = jnp.einsum('bihqk,bikhc->biqhc', a, vh, precision=hi)

    g = jax.nn.sigmoid(jnp.einsum('bijc,cd->bijd', xn, wg, precision=hi) + bg[0])
    o = o * g.reshape(B, N, N, H, C)
    out = jnp.einsum('bijd,dc->bijc', o.reshape(B, N, N, HC), wo,
                     precision=hi) + bo[0]
    if not starting:
        out = jnp.swapaxes(out, -2, -3)
    return out


# --------------------------------------------------------------------------
if __name__ == "__main__":
    B, N = 2, 16            # batch, N_rigid
    c_z = 32                # pair channel dim
    H = 4                   # no_heads
    C = 16                  # per-head hidden dim (OpenFold Attention semantics)
    HC = H * C

    key = jax.random.PRNGKey(0)
    ks = jax.random.split(key, 12)

    # Deterministic synthetic parameters (torch Linear weights stored transposed).
    lnw = 1.0 + 0.1 * jax.random.normal(ks[10], (1, c_z), jnp.float32)
    lnb = 0.1 * jax.random.normal(ks[11], (1, c_z), jnp.float32)
    wlin_t = 0.1 * jax.random.normal(ks[0], (H, c_z), jnp.float32)
    wq = 0.1 * jax.random.normal(ks[1], (c_z, HC), jnp.float32)
    wk = 0.1 * jax.random.normal(ks[2], (c_z, HC), jnp.float32)
    wv = 0.1 * jax.random.normal(ks[3], (c_z, HC), jnp.float32)
    wg = 0.1 * jax.random.normal(ks[4], (c_z, HC), jnp.float32)
    bg = 0.1 * jax.random.normal(ks[5], (1, HC), jnp.float32)
    wo = 0.1 * jax.random.normal(ks[6], (HC, c_z), jnp.float32)
    bo = 0.1 * jax.random.normal(ks[7], (1, c_z), jnp.float32)
    params = (lnw, lnb, wlin_t, wq, wk, wv, wg, bg, wo, bo)

    x = jax.random.normal(ks[8], (B, N, N, c_z), jnp.float32)
    mask = jax.random.bernoulli(ks[9], 0.9, (B, N, N)).astype(jnp.float32)

    for starting in (True, False):
        ref = jax.block_until_ready(
            triangle_attention_ref(x, mask, params, starting=starting))
        # f32 MXU operands (default precision) and bf16 MXU operands (v6e/v7x
        # fast path); the reference uses Precision.HIGHEST, hence the
        # deliberately wider tolerance for the bf16-operand run.
        for cdt, tol in ((jnp.float32, 5e-3), (jnp.bfloat16, 5e-2)):
            out = jax.block_until_ready(
                triangle_attention(x, mask, params, starting=starting,
                                   compute_dtype=cdt))
            assert out.shape == (B, N, N, c_z)
            err = float(jnp.max(jnp.abs(out - ref)))
            assert err < tol, (
                f"starting={starting} dtype={cdt}: max abs error {err}")

    print("KERNEL_OK")
</pallas_src>

<mosaic_0001>
module attributes {stable_mosaic.version = 11 : i64} {
  func.func @_ln_bias_kernel(%arg0: i32, %arg1: i32, %arg2: memref<1x8x16x32xf32, #tpu.memory_space<vmem>>, %arg3: memref<1x32xf32, #tpu.memory_space<vmem>>, %arg4: memref<1x32xf32, #tpu.memory_space<vmem>>, %arg5: memref<4x32xf32, #tpu.memory_space<vmem>>, %arg6: memref<1x4x128xf32, #tpu.memory_space<vmem>>) attributes {dimension_semantics = [#tpu.dimension_semantics<parallel>, #tpu.dimension_semantics<parallel>], iteration_bounds = array<i64: 2, 2>, scalar_prefetch = 0 : i64, scratch_operands = 0 : i64, tpu.core_type = #tpu.core_type<tc>, window_params = [{transform_indices = @transform_0, window_bounds = array<i64: 1, 8, 16, 32>}, {pipeline_mode = #tpu.pipeline_mode<synchronous>, transform_indices = @transform_1, window_bounds = array<i64: 1, 32>}, {pipeline_mode = #tpu.pipeline_mode<synchronous>, transform_indices = @transform_2, window_bounds = array<i64: 1, 32>}, {pipeline_mode = #tpu.pipeline_mode<synchronous>, transform_indices = @transform_3, window_bounds = array<i64: 4, 32>}, {transform_indices = @transform_4, window_bounds = array<i64: 1, 4, 128>}]} {
    %c0 = arith.constant 0 : index
    %c0_0 = arith.constant 0 : index
    %c0_1 = arith.constant 0 : index
    %c0_2 = arith.constant 0 : index
    %0 = vector.load %arg2[%c0, %c0_0, %c0_1, %c0_2] : memref<1x8x16x32xf32, #tpu.memory_space<vmem>>, vector<1x8x16x32xf32>
    %1 = vector.shape_cast %0 : vector<1x8x16x32xf32> to vector<8x16x32xf32>
    %c0_3 = arith.constant 0 : index
    %c0_4 = arith.constant 0 : index
    %2 = vector.load %arg3[%c0_3, %c0_4] : memref<1x32xf32, #tpu.memory_space<vmem>>, vector<1x32xf32>
    %c0_5 = arith.constant 0 : index
    %c0_6 = arith.constant 0 : index
    %3 = vector.load %arg4[%c0_5, %c0_6] : memref<1x32xf32, #tpu.memory_space<vmem>>, vector<1x32xf32>
    %cst = arith.constant dense<0.000000e+00> : vector<8x16xf32>
    %4 = vector.multi_reduction <add>, %1, %cst [2] : vector<8x16x32xf32> to vector<8x16xf32>
    %5 = vector.shape_cast %4 : vector<8x16xf32> to vector<8x16x1xf32>
    %cst_7 = arith.constant 3.200000e+01 : f32
    %6 = vector.broadcast %cst_7 : f32 to vector<8x16x1xf32>
    %7 = arith.divf %5, %6 : vector<8x16x1xf32>
    %8 = vector.broadcast %7 : vector<8x16x1xf32> to vector<8x16x32xf32>
    %9 = arith.subf %1, %8 : vector<8x16x32xf32>
    %10 = arith.mulf %9, %9 : vector<8x16x32xf32>
    %cst_8 = arith.constant dense<0.000000e+00> : vector<8x16xf32>
    %11 = vector.multi_reduction <add>, %10, %cst_8 [2] : vector<8x16x32xf32> to vector<8x16xf32>
    %12 = vector.shape_cast %11 : vector<8x16xf32> to vector<8x16x1xf32>
    %cst_9 = arith.constant 3.200000e+01 : f32
    %13 = vector.broadcast %cst_9 : f32 to vector<8x16x1xf32>
    %14 = arith.divf %12, %13 : vector<8x16x1xf32>
    %15 = vector.broadcast %7 : vector<8x16x1xf32> to vector<8x16x32xf32>
    %16 = arith.subf %1, %15 : vector<8x16x32xf32>
    %cst_10 = arith.constant 9.99999974E-6 : f32
    %17 = vector.broadcast %cst_10 : f32 to vector<8x16x1xf32>
    %18 = arith.addf %14, %17 : vector<8x16x1xf32>
    %19 = math.rsqrt %18 : vector<8x16x1xf32>
    %20 = vector.broadcast %19 : vector<8x16x1xf32> to vector<8x16x32xf32>
    %21 = arith.mulf %16, %20 : vector<8x16x32xf32>
    %22 = vector.shape_cast %2 : vector<1x32xf32> to vector<1x1x32xf32>
    %23 = vector.broadcast %22 : vector<1x1x32xf32> to vector<8x16x32xf32>
    %24 = arith.mulf %21, %23 : vector<8x16x32xf32>
    %25 = vector.shape_cast %3 : vector<1x32xf32> to vector<1x1x32xf32>
    %26 = vector.broadcast %25 : vector<1x1x32xf32> to vector<8x16x32xf32>
    %27 = arith.addf %24, %26 : vector<8x16x32xf32>
    %28 = vector.shape_cast %27 : vector<8x16x32xf32> to vector<128x32xf32>
    %c0_11 = arith.constant 0 : index
    %c0_12 = arith.constant 0 : index
    %29 = vector.load %arg5[%c0_11, %c0_12] : memref<4x32xf32, #tpu.memory_space<vmem>>, vector<4x32xf32>
    %cst_13 = arith.constant dense<0.000000e+00> : vector<4x128xf32>
    %30 = tpu.matmul %29, %28, %cst_13 {dimension_numbers = #tpu.dot_dimension_numbers<[1], [1], [0], [0], [0, 0, 1, 0], [], []>} : vector<4x32xf32>, vector<128x32xf32>, vector<4x128xf32> -> vector<4x128xf32>
    %c0_14 = arith.constant 0 : index
    %c0_15 = arith.constant 0 : index
    %c0_16 = arith.constant 0 : index
    %31 = vector.load %arg6[%c0_14, %c0_15, %c0_16] : memref<1x4x128xf32, #tpu.memory_space<vmem>>, vector<1x4x128xf32>
    %32 = vector.shape_cast %31 : vector<1x4x128xf32> to vector<4x128xf32>
    %33 = vector.shape_cast %30 : vector<4x128xf32> to vector<1x4x128xf32>
    tpu.vector_store %arg6[%c0_14, %c0_15, %c0_16], %33 {strides = array<i32>} : memref<1x4x128xf32, #tpu.memory_space<vmem>>, vector<1x4x128xf32>,
    return
  }
  func.func @transform_0(%arg0: i32, %arg1: i32) -> (i32, i32, i32, i32) {
    %c0_i32 = arith.constant 0 : i32
    %c0_i32_0 = arith.constant 0 : i32
    %c0_i32_1 = arith.constant 0 : i32
    return %arg0, %arg1, %c0_i32, %c0_i32_0 : i32, i32, i32, i32
  }
  func.func @transform_1(%arg0: i32, %arg1: i32) -> (i32, i32) {
    %c0_i32 = arith.constant 0 : i32
    %c0_i32_0 = arith.constant 0 : i32
    %c0_i32_1 = arith.constant 0 : i32
    return %c0_i32, %c0_i32_0 : i32, i32
  }
  func.func @transform_2(%arg0: i32, %arg1: i32) -> (i32, i32) {
    %c0_i32 = arith.constant 0 : i32
    %c0_i32_0 = arith.constant 0 : i32
    %c0_i32_1 = arith.constant 0 : i32
    return %c0_i32, %c0_i32_0 : i32, i32
  }
  func.func @transform_3(%arg0: i32, %arg1: i32) -> (i32, i32) {
    %c0_i32 = arith.constant 0 : i32
    %c0_i32_0 = arith.constant 0 : i32
    %c0_i32_1 = arith.constant 0 : i32
    return %c0_i32, %c0_i32_0 : i32, i32
  }
  func.func @transform_4(%arg0: i32, %arg1: i32) -> (i32, i32, i32) {
    %c0_i32 = arith.constant 0 : i32
    %c0_i32_0 = arith.constant 0 : i32
    return %arg0, %c0_i32, %arg1 : i32, i32, i32
  }
}

</mosaic_0001>

<llo_original>
// kernel: tpu_custom_call.1
$region0: #{tpu_custom_call.1}
  #allocation0 [shape = 'u32[]', space=smem, size = 0x4, offset = 0x4, fixed_abs, tag = 'smem constant byte address 0x4 - core index']
  #allocation1 [shape = 'u32[144,128]{1,0:T(1,128)}', space=vmem, size = 0x12000, scoped, tag = 'internal scratch']
  %s0 = inlined_call_operand.hbm [shape: f32[2,16,16,32], index: 0, kind: input, shape index: {}]
  %s1 = inlined_call_operand.vmem [shape: f32[1,32], index: 1, kind: input, shape index: {}]
  %s2 = inlined_call_operand.vmem [shape: f32[1,32], index: 2, kind: input, shape index: {}]
  %s3 = inlined_call_operand.vmem [shape: f32[4,32], index: 3, kind: input, shape index: {}]
  %s4 = inlined_call_operand.hbm [shape: f32[2,4,256], index: 4, kind: output, shape index: {}]
  %s5 = sld [smem:[#allocation0]]
  $region53: #{tpu_custom_call.1} parent=0
    _
  %s7 = ssub.s32 1, %s5
  %s8 = scalar_select 0, %s7, %s5
  $region1: #{tpu_custom_call.1} parent=0
    #allocation2 [shape = 'u8[131072]{0}', space=vmem, size = 0x20000, scoped, tag = 'input window, operand 0']
    #allocation3 [shape = 's32[2]{0}', space=sflag, size = 0x8, scoped, tag = 'scoped memory for tpu_custom_call.1']
    #allocation4 [shape = 's32[2]{0}', space=sflag, size = 0x8, scoped, tag = 'scoped memory for tpu_custom_call.1']
    #allocation5 [shape = 'u8[4096]{0}', space=vmem, size = 0x1000, scoped, tag = 'output window, operand 0']
    %9 = vsyncpa [#allocation3], 0
    %s10 = scalar_lea.sflag [#allocation3], 1
    %11 = vsyncpa %s10, 0
    %12 = vsyncpa [#allocation4], 0
    %s13 = scalar_lea.sflag [#allocation4], 1
    %14 = vsyncpa %s13, 0
    loop: start=0, step=1, limit=6
    $region2: #{tpu_custom_call.1} parent=1 // loop_pre_header
      _
    $region3: #{tpu_custom_call.1} parent=1 // loop_header
      %s16 = sphi 0, %s20
      %p17 = scmp.ge.s32.totalorder %s16, 6
      %s23 = sphi 0, %s35
      %s24 = sphi 0, %s31
      %s25 = sphi 0, %s23
      %s26 = sphi 0, %s24
      %s27 = sphi 0, %s25
      %s28 = sphi 0, %s26
      %s40 = sphi 0, %s42
      %s43 = sphi 0, %s40
      %s44 = sphi 0, %s43
      %s60 = sphi 0, %s44
      %s64 = sphi 0, %s64
      %s66 = sphi 0, %s64
      %s67 = sphi 0, %s66
      %s81 = sphi 0, %s67
      %s85 = sphi 0, %s85
      %s87 = sphi 0, %s85
      %s88 = sphi 0, %s87
      %s102 = sphi 0, %s88
      %s106 = sphi 0, %s106
      %s108 = sphi 0, %s106
      %s109 = sphi 0, %s108
      %s123 = sphi 0, %s109
      %s131 = sphi 0, %s133
      %s134 = sphi 0, %s131
      %s135 = sphi 0, %s134
      %s151 = sphi 0, %s135
    $region4: #{tpu_custom_call.1} parent=1 // loop_header_branch
      %19 = sbr.rel (%p17) target = $region8
    $region5: #{tpu_custom_call.1} parent=1 // loop_body
      %s21 = ssub.s32 %s16, 1
      %s22 = ssub.s32 %s16, 2
      %s29 = sadd.s32 1, %s24
      %p30 = scmp.ge.s32.totalorder %s29, 2
      %s31 = scalar_select %p30, 0, %s29
      %s32 = sadd.s32 1, %s23
      %s33 = scalar_select %p30, %s32, %s23
      %p34 = scmp.ge.s32.totalorder %s33, 2
      %s35 = scalar_select %p34, 0, %s33
      %s36 = ssub.s32 %s23, %s35
      %s37 = ssub.s32 %s24, %s31
      %s38 = sor.u32 %s36, %s37
      %p39 = scmp.eq.s32.totalorder %s38, 0
      %s41 = sadd.s32 %s40, 1
      %s42 = scalar_select %p39, %s40, %s41
      %p45 = pneg %p39
      %p46 = scmp.eq.s32.totalorder %s16, 3
      %p47 = por %p45, %p46
      %p48 = scmp.ne.s32.totalorder %s40, %s43
      %p49 = scmp.eq.s32.totalorder %s16, 0
      %p50 = por %p48, %p49
      %p51 = scmp.ne.s32.totalorder %s40, %s43
      %p52 = scmp.eq.s32.totalorder %s21, 3
      %p53 = por %p51, %p52
      %p54 = scmp.ne.s32.totalorder %s43, %s44
      %p55 = scmp.eq.s32.totalorder %s21, 0
      %p56 = por %p54, %p55
      %p57 = scmp.ne.s32.totalorder %s43, %s44
      %p58 = scmp.eq.s32.totalorder %s22, 3
      %p59 = por %p57, %p58
      %p61 = scmp.ne.s32.totalorder %s44, %s60
      %p62 = scmp.eq.s32.totalorder %s22, 0
      %p63 = por %p61, %p62
      %s65 = sadd.s32 %s64, 1
      %p68 = scmp.eq.s32.totalorder %s16, 3
      %p69 = scmp.ne.s32.totalorder %s64, %s66
      %p70 = scmp.eq.s32.totalorder %s16, 0
      %p71 = por %p69, %p70
      %p72 = scmp.ne.s32.totalorder %s64, %s66
      %p73 = scmp.eq.s32.totalorder %s21, 3
      %p74 = por %p72, %p73
      %p75 = scmp.ne.s32.totalorder %s66, %s67
      %p76 = scmp.eq.s32.totalorder %s21, 0
      %p77 = por %p75, %p76
      %p78 = scmp.ne.s32.totalorder %s66, %s67
      %p79 = scmp.eq.s32.totalorder %s22, 3
      %p80 = por %p78, %p79
      %p82 = scmp.ne.s32.totalorder %s67, %s81
      %p83 = scmp.eq.s32.totalorder %s22, 0
      %p84 = por %p82, %p83
      %s86 = sadd.s32 %s85, 1
      %p89 = scmp.eq.s32.totalorder %s16, 3
      %p90 = scmp.ne.s32.totalorder %s85, %s87
      %p91 = scmp.eq.s32.totalorder %s16, 0
      %p92 = por %p90, %p91
      %p93 = scmp.ne.s32.totalorder %s85, %s87
      %p94 = scmp.eq.s32.totalorder %s21, 3
      %p95 = por %p93, %p94
      %p96 = scmp.ne.s32.totalorder %s87, %s88
      %p97 = scmp.eq.s32.totalorder %s21, 0
      %p98 = por %p96, %p97
      %p99 = scmp.ne.s32.totalorder %s87, %s88
      %p100 = scmp.eq.s32.totalorder %s22, 3
      %p101 = por %p99, %p100
      %p103 = scmp.ne.s32.totalorder %s88, %s102
      %p104 = scmp.eq.s32.totalorder %s22, 0
      %p105 = por %p103, %p104
      %s107 = sadd.s32 %s106, 1
      %p110 = scmp.eq.s32.totalorder %s16, 3
      %p111 = scmp.ne.s32.totalorder %s106, %s108
      %p112 = scmp.eq.s32.totalorder %s16, 0
      %p113 = por %p111, %p112
      %p114 = scmp.ne.s32.totalorder %s106, %s108
      %p115 = scmp.eq.s32.totalorder %s21, 3
      %p116 = por %p114, %p115
      %p117 = scmp.ne.s32.totalorder %s108, %s109
      %p118 = scmp.eq.s32.totalorder %s21, 0
      %p119 = por %p117, %p118
      %p120 = scmp.ne.s32.totalorder %s108, %s109
      %p121 = scmp.eq.s32.totalorder %s22, 3
      %p122 = por %p120, %p121
      %p124 = scmp.ne.s32.totalorder %s109, %s123
      %p125 = scmp.eq.s32.totalorder %s22, 0
      %p126 = por %p124, %p125
      %s127 = ssub.s32 %s23, %s35
      %s128 = ssub.s32 %s24, %s31
      %s129 = sor.u32 %s127, %s128
      %p130 = scmp.eq.s32.totalorder %s129, 0
      %s132 = sadd.s32 %s131, 1
      %s133 = scalar_select %p130, %s131, %s132
      %p136 = pneg %p130
      %p137 = scmp.eq.s32.totalorder %s16, 3
      %p138 = por %p136, %p137
      %p139 = scmp.ne.s32.totalorder %s131, %s134
      %p140 = scmp.eq.s32.totalorder %s16, 0
      %p141 = por %p139, %p140
      %p142 = scmp.ne.s32.totalorder %s131, %s134
      %p143 = scmp.eq.s32.totalorder %s21, 3
      %p144 = por %p142, %p143
      %p145 = scmp.ne.s32.totalorder %s134, %s135
      %p146 = scmp.eq.s32.totalorder %s21, 0
      %p147 = por %p145, %p146
      %p148 = scmp.ne.s32.totalorder %s134, %s135
      %p149 = scmp.eq.s32.totalorder %s22, 3
      %p150 = por %p148, %p149
      %p152 = scmp.ne.s32.totalorder %s135, %s151
      %p153 = scmp.eq.s32.totalorder %s22, 0
      %p154 = por %p152, %p153
      %p155 = scmp.le.s32.totalorder 1, %s16
      %p156 = scmp.lt.s32.totalorder %s16, 5
      %p157 = pnand %p155, %p156
      %p158 = pneg %p157
      // Predicated region
      $region9: #{tpu_custom_call.1} parent=5 // pred_check
        _
      $region10: #{tpu_custom_call.1} parent=5 // pred_check_branch
        %160 = sbr.rel (%p157) target = $region12
      $region11: #{tpu_custom_call.1} parent=5 // pred_region
        %s161 = ssub.s32 %s16, 1
        // Predicated region
        $region13: #{tpu_custom_call.1} parent=11 // pred_check
          %p162 = pneg %p77
        $region14: #{tpu_custom_call.1} parent=11 // pred_check_branch
          %164 = sbr.rel (%p162) target = $region16
        $region15: #{tpu_custom_call.1} parent=11 // pred_region
          _
        $region16: #{tpu_custom_call.1} parent=11 // pred_fallthru
          _
        // Predicated region
        $region17: #{tpu_custom_call.1} parent=11 // pred_check
          %p165 = pneg %p98
        $region18: #{tpu_custom_call.1} parent=11 // pred_check_branch
          %167 = sbr.rel (%p165) target = $region20
        $region19: #{tpu_custom_call.1} parent=11 // pred_region
          _
        $region20: #{tpu_custom_call.1} parent=11 // pred_fallthru
          _
        // Predicated region
        $region21: #{tpu_custom_call.1} parent=11 // pred_check
          %p168 = pneg %p119
        $region22: #{tpu_custom_call.1} parent=11 // pred_check_branch
          %170 = sbr.rel (%p168) target = $region24
        $region23: #{tpu_custom_call.1} parent=11 // pred_region
          _
        $region24: #{tpu_custom_call.1} parent=11 // pred_fallthru
          _
      $region12: #{tpu_custom_call.1} parent=5 // pred_fallthru
        _
      %p171 = scmp.lt.s32.totalorder %s16, 4
      // Predicated region
      $region25: #{tpu_custom_call.1} parent=5 // pred_check
        %p172 = pneg %p171
      $region26: #{tpu_custom_call.1} parent=5 // pred_check_branch
        %174 = sbr.rel (%p172) target = $region28
      $region27: #{tpu_custom_call.1} parent=5 // pred_region
        // Predicated region
        $region29: #{tpu_custom_call.1} parent=27 // pred_check
          %p175 = pneg %p50
        $region30: #{tpu_custom_call.1} parent=27 // pred_check_branch
          %177 = sbr.rel (%p175) target = $region32
        $region31: #{tpu_custom_call.1} parent=27 // pred_region
          %s178 = sand.u32 %s40, 1
          %s179 = scalar_lea.sflag [#allocation3], %s178
          %s180 = sand.u32 %s40, 1
          %s181 = smul.addr %s180, 128
          %s182 = scalar_lea.vmem [#allocation2], %s181
          %s183 = smul.u32 8, %s24
          %s185 = ssub.s32 2048, 2048
          %186 = vsyncadd %s179, %s185
          %s187 = smul.addr %s183, 2
          %s188 = smul.addr %s23, 32
          %s189 = sadd.s32 %s187, %s188
          %s190 = smul.addr %s189, 128
          %s191 = scalar_lea.hbm %s0, %s190
          %s192 = sshll.u32 %s182, 4
          %s193 = int_to_ptr.vmem [resolvable:$true] %s192
          %198 = dma.hbm_to_vmem [thread:$0]  %s191, 2048, %s193, %s179, 128, 128, 8
        $region32: #{tpu_custom_call.1} parent=27 // pred_fallthru
          _
      $region28: #{tpu_custom_call.1} parent=5 // pred_fallthru
        _
      %p199 = scmp.le.s32.totalorder 1, %s16
      %p200 = scmp.lt.s32.totalorder %s16, 5
      %p201 = pnand %p199, %p200
      %p202 = pneg %p201
      // Predicated region
      $region33: #{tpu_custom_call.1} parent=5 // pred_check
        _
      $region34: #{tpu_custom_call.1} parent=5 // pred_check_branch
        %204 = sbr.rel (%p201) target = $region36
      $region35: #{tpu_custom_call.1} parent=5 // pred_region
        %s205 = ssub.s32 %s16, 1
        %s206 = sand.u32 %s43, 1
        %s207 = scalar_lea.sflag [#allocation3], %s206
        %s208 = sand.u32 %s43, 1
        %s209 = smul.addr %s208, 128
        %s210 = scalar_lea.vmem [#allocation2], %s209
        // Predicated region
        $region37: #{tpu_custom_call.1} parent=35 // pred_check
          %p211 = pneg %p56
        $region38: #{tpu_custom_call.1} parent=35 // pred_check_branch
          %213 = sbr.rel (%p211) target = $region40
        $region39: #{tpu_custom_call.1} parent=35 // pred_region
          %214 = dma.done %s207, 2048
        $region40: #{tpu_custom_call.1} parent=35 // pred_fallthru
          _
        %s215 = sand.u32 %s43, 1
        %s216 = scalar_lea.sflag [#allocation3], %s215
        %s217 = sand.u32 %s43, 1
        %s218 = smul.addr %s217, 128
        %s219 = scalar_lea.vmem [#allocation2], %s218
        %p220 = pneg %p56
        %p221 = pneg %p53
        %p222 = pneg %p77
        %p223 = pneg %p74
        %p224 = pneg %p98
        %p225 = pneg %p95
        %p226 = pneg %p119
        %p227 = pneg %p116
        %p228 = pneg %p147
        %p229 = pneg %p144
        %s230 = sand.u32 %s134, 1
        %s231 = scalar_lea.sflag [#allocation4], %s230
        %s232 = sand.u32 %s134, 1
        %s233 = smul.addr %s232, 4
        %s234 = scalar_lea.vmem [#allocation5], %s233
        %s235 = smul.u32 8, %s26
        %v236 = vld [vmem:[%s210] sm:$0xff]
        %v237 = vld [vmem:[%s210 + $0x8] sm:$0xff]
        %v238 = vld [vmem:[%s210 + $0x10] sm:$0xff]
        %v239 = vld [vmem:[%s210 + $0x18] sm:$0xff]
        %v240 = vld [vmem:[%s210 + $0x20] sm:$0xff]
        %v241 = vld [vmem:[%s210 + $0x28] sm:$0xff]
        %v242 = vld [vmem:[%s210 + $0x30] sm:$0xff]
        %v243 = vld [vmem:[%s210 + $0x38] sm:$0xff]
        %v244 = vld [vmem:[%s210 + $0x40] sm:$0xff]
        %v245 = vld [vmem:[%s210 + $0x48] sm:$0xff]
        %v246 = vld [vmem:[%s210 + $0x50] sm:$0xff]
        %v247 = vld [vmem:[%s210 + $0x58] sm:$0xff]
        %v248 = vld [vmem:[%s210 + $0x60] sm:$0xff]
        %v249 = vld [vmem:[%s210 + $0x68] sm:$0xff]
        %v250 = vld [vmem:[%s210 + $0x70] sm:$0xff]
        %v251 = vld [vmem:[%s210 + $0x78] sm:$0xff]
        %v252 = vld [vmem:[%s1] sm:$0x1]
        %v253 = vld [vmem:[%s2] sm:$0x1]
        %vm254 = vcmask 261120
        %v255 = vsel %vm254, %v236, 0.0
        %256 = vadd.xlane.f32.xlu0 %v255
        %v257 = vpop.xlane.xlu0 %256
        %v258 = vsel %vm254, %v237, 0.0
        %259 = vadd.xlane.f32.xlu0 %v258
        %v260 = vpop.xlane.xlu0 %259
        %v261 = vsel %vm254, %v238, 0.0
        %262 = vadd.xlane.f32.xlu0 %v261
        %v263 = vpop.xlane.xlu0 %262
        %v264 = vsel %vm254, %v239, 0.0
        %265 = vadd.xlane.f32.xlu0 %v264
        %v266 = vpop.xlane.xlu0 %265
        %v267 = vsel %vm254, %v240, 0.0
        %268 = vadd.xlane.f32.xlu0 %v267
        %v269 = vpop.xlane.xlu0 %268
        %v270 = vsel %vm254, %v241, 0.0
        %271 = vadd.xlane.f32.xlu0 %v270
        %v272 = vpop.xlane.xlu0 %271
        %v273 = vsel %vm254, %v242, 0.0
        %274 = vadd.xlane.f32.xlu0 %v273
        %v275 = vpop.xlane.xlu0 %274
        %v276 = vsel %vm254, %v243, 0.0
        %277 = vadd.xlane.f32.xlu0 %v276
        %v278 = vpop.xlane.xlu0 %277
        %v279 = vsel %vm254, %v244, 0.0
        %280 = vadd.xlane.f32.xlu0 %v279
        %v281 = vpop.xlane.xlu0 %280
        %v282 = vsel %vm254, %v245, 0.0
        %283 = vadd.xlane.f32.xlu0 %v282
        %v284 = vpop.xlane.xlu0 %283
        %v285 = vsel %vm254, %v246, 0.0
        %286 = vadd.xlane.f32.xlu0 %v285
        %v287 = vpop.xlane.xlu0 %286
        %v288 = vsel %vm254, %v247, 0.0
        %289 = vadd.xlane.f32.xlu0 %v288
        %v290 = vpop.xlane.xlu0 %289
        %v291 = vsel %vm254, %v248, 0.0
        %292 = vadd.xlane.f32.xlu0 %v291
        %v293 = vpop.xlane.xlu0 %292
        %v294 = vsel %vm254, %v249, 0.0
        %295 = vadd.xlane.f32.xlu0 %v294
        %v296 = vpop.xlane.xlu0 %295
        %v297 = vsel %vm254, %v250, 0.0
        %298 = vadd.xlane.f32.xlu0 %v297
        %v299 = vpop.xlane.xlu0 %298
        %v300 = vsel %vm254, %v251, 0.0
        %301 = vadd.xlane.f32.xlu0 %v300
        %v302 = vpop.xlane.xlu0 %301
        %v303 = vrcp.pop 32.0
        %v304 = vmul.f32 %v257, %v303
        %v305 = vmul.f32 %v260, %v303
        %v306 = vmul.f32 %v263, %v303
        %v307 = vmul.f32 %v266, %v303
        %v308 = vmul.f32 %v269, %v303
        %v309 = vmul.f32 %v272, %v303
        %v310 = vmul.f32 %v275, %v303
        %v311 = vmul.f32 %v278, %v303
        %v312 = vmul.f32 %v281, %v303
        %v313 = vmul.f32 %v284, %v303
        %v314 = vmul.f32 %v287, %v303
        %v315 = vmul.f32 %v290, %v303
        %v316 = vmul.f32 %v293, %v303
        %v317 = vmul.f32 %v296, %v303
        %v318 = vmul.f32 %v299, %v303
        %v319 = vmul.f32 %v302, %v303
        %v320 = vsub.f32 %v236, %v304
        %v321 = vsub.f32 %v237, %v305
        %v322 = vsub.f32 %v238, %v306
        %v323 = vsub.f32 %v239, %v307
        %v324 = vsub.f32 %v240, %v308
        %v325 = vsub.f32 %v241, %v309
        %v326 = vsub.f32 %v242, %v310
        %v327 = vsub.f32 %v243, %v311
        %v328 = vsub.f32 %v244, %v312
        %v329 = vsub.f32 %v245, %v313
        %v330 = vsub.f32 %v246, %v314
        %v331 = vsub.f32 %v247, %v315
        %v332 = vsub.f32 %v248, %v316
        %v333 = vsub.f32 %v249, %v317
        %v334 = vsub.f32 %v250, %v318
        %v335 = vsub.f32 %v251, %v319
        %v336 = vmul.f32 %v320, %v320
        %v337 = vmul.f32 %v321, %v321
        %v338 = vmul.f32 %v322, %v322
        %v339 = vmul.f32 %v323, %v323
        %v340 = vmul.f32 %v324, %v324
        %v341 = vmul.f32 %v325, %v325
        %v342 = vmul.f32 %v326, %v326
        %v343 = vmul.f32 %v327, %v327
        %v344 = vmul.f32 %v328, %v328
        %v345 = vmul.f32 %v329, %v329
        %v346 = vmul.f32 %v330, %v330
        %v347 = vmul.f32 %v331, %v331
        %v348 = vmul.f32 %v332, %v332
        %v349 = vmul.f32 %v333, %v333
        %v350 = vmul.f32 %v334, %v334
        %v351 = vmul.f32 %v335, %v335
        %v352 = vsel %vm254, %v336, 0.0
        %353 = vadd.xlane.f32.xlu0 %v352
        %v354 = vpop.xlane.xlu0 %353
        %v355 = vsel %vm254, %v337, 0.0
        %356 = vadd.xlane.f32.xlu0 %v355
        %v357 = vpop.xlane.xlu0 %356
        %v358 = vsel %vm254, %v338, 0.0
        %359 = vadd.xlane.f32.xlu0 %v358
        %v360 = vpop.xlane.xlu0 %359
        %v361 = vsel %vm254, %v339, 0.0
        %362 = vadd.xlane.f32.xlu0 %v361
        %v363 = vpop.xlane.xlu0 %362
        %v364 = vsel %vm254, %v340, 0.0
        %365 = vadd.xlane.f32.xlu0 %v364
        %v366 = vpop.xlane.xlu0 %365
        %v367 = vsel %vm254, %v341, 0.0
        %368 = vadd.xlane.f32.xlu0 %v367
        %v369 = vpop.xlane.xlu0 %368
        %v370 = vsel %vm254, %v342, 0.0
        %371 = vadd.xlane.f32.xlu0 %v370
        %v372 = vpop.xlane.xlu0 %371
        %v373 = vsel %vm254, %v343, 0.0
        %374 = vadd.xlane.f32.xlu0 %v373
        %v375 = vpop.xlane.xlu0 %374
        %v376 = vsel %vm254, %v344, 0.0
        %377 = vadd.xlane.f32.xlu0 %v376
        %v378 = vpop.xlane.xlu0 %377
        %v379 = vsel %vm254, %v345, 0.0
        %380 = vadd.xlane.f32.xlu0 %v379
        %v381 = vpop.xlane.xlu0 %380
        %v382 = vsel %vm254, %v346, 0.0
        %383 = vadd.xlane.f32.xlu0 %v382
        %v384 = vpop.xlane.xlu0 %383
        %v385 = vsel %vm254, %v347, 0.0
        %386 = vadd.xlane.f32.xlu0 %v385
        %v387 = vpop.xlane.xlu0 %386
        %v388 = vsel %vm254, %v348, 0.0
        %389 = vadd.xlane.f32.xlu0 %v388
        %v390 = vpop.xlane.xlu0 %389
        %v391 = vsel %vm254, %v349, 0.0
        %392 = vadd.xlane.f32.xlu0 %v391
        %v393 = vpop.xlane.xlu0 %392
        %v394 = vsel %vm254, %v350, 0.0
        %395 = vadd.xlane.f32.xlu0 %v394
        %v396 = vpop.xlane.xlu0 %395
        %v397 = vsel %vm254, %v351, 0.0
        %398 = vadd.xlane.f32.xlu0 %v397
        %v399 = vpop.xlane.xlu0 %398
        %v400 = vmul.f32 %v354, %v303
        %v401 = vmul.f32 %v357, %v303
        %v402 = vmul.f32 %v360, %v303
        %v403 = vmul.f32 %v363, %v303
        %v404 = vmul.f32 %v366, %v303
        %v405 = vmul.f32 %v369, %v303
        %v406 = vmul.f32 %v372, %v303
        %v407 = vmul.f32 %v375, %v303
        %v408 = vmul.f32 %v378, %v303
        %v409 = vmul.f32 %v381, %v303
        %v410 = vmul.f32 %v384, %v303
        %v411 = vmul.f32 %v387, %v303
        %v412 = vmul.f32 %v390, %v303
        %v413 = vmul.f32 %v393, %v303
        %v414 = vmul.f32 %v396, %v303
        %v415 = vmul.f32 %v399, %v303
        %v416 = vadd.f32 %v400, 1e-05
        %v417 = vadd.f32 %v401, 1e-05
        %v418 = vadd.f32 %v402, 1e-05
        %v419 = vadd.f32 %v403, 1e-05
        %v420 = vadd.f32 %v404, 1e-05
        %v421 = vadd.f32 %v405, 1e-05
        %v422 = vadd.f32 %v406, 1e-05
        %v423 = vadd.f32 %v407, 1e-05
        %v424 = vadd.f32 %v408, 1e-05
        %v425 = vadd.f32 %v409, 1e-05
        %v426 = vadd.f32 %v410, 1e-05
        %v427 = vadd.f32 %v411, 1e-05
        %v428 = vadd.f32 %v412, 1e-05
        %v429 = vadd.f32 %v413, 1e-05
        %v430 = vadd.f32 %v414, 1e-05
        %v431 = vadd.f32 %v415, 1e-05
        %v432 = vrsqrt.pop %v416
        %v433 = vrsqrt.pop %v417
        %v434 = vrsqrt.pop %v418
        %v435 = vrsqrt.pop %v419
        %v436 = vrsqrt.pop %v420
        %v437 = vrsqrt.pop %v421
        %v438 = vrsqrt.pop %v422
        %v439 = vrsqrt.pop %v423
        %v440 = vrsqrt.pop %v424
        %v441 = vrsqrt.pop %v425
        %v442 = vrsqrt.pop %v426
        %v443 = vrsqrt.pop %v427
        %v444 = vrsqrt.pop %v428
        %v445 = vrsqrt.pop %v429
        %v446 = vrsqrt.pop %v430
        %v447 = vrsqrt.pop %v431
        %v448 = vmul.f32 %v320, %v432
        %v449 = vmul.f32 %v321, %v433
        %v450 = vmul.f32 %v322, %v434
        %v451 = vmul.f32 %v323, %v435
        %v452 = vmul.f32 %v324, %v436
        %v453 = vmul.f32 %v325, %v437
        %v454 = vmul.f32 %v326, %v438
        %v455 = vmul.f32 %v327, %v439
        %v456 = vmul.f32 %v328, %v440
        %v457 = vmul.f32 %v329, %v441
        %v458 = vmul.f32 %v330, %v442
        %v459 = vmul.f32 %v331, %v443
        %v460 = vmul.f32 %v332, %v444
        %v461 = vmul.f32 %v333, %v445
        %v462 = vmul.f32 %v334, %v446
        %v463 = vmul.f32 %v335, %v447
        %v465 = vlaneseq
        %v466 = vshrl.u32 %v465, 7
        %v467 = vsub.s32 0, %v466
        %v468 = vrot.slane %v252, %v467
        %v470 = vmul.f32 %v448, %v468
        %v471 = vmul.f32 %v449, %v468
        %v472 = vmul.f32 %v450, %v468
        %v473 = vmul.f32 %v451, %v468
        %v474 = vmul.f32 %v452, %v468
        %v475 = vmul.f32 %v453, %v468
        %v476 = vmul.f32 %v454, %v468
        %v477 = vmul.f32 %v455, %v468
        %v478 = vmul.f32 %v456, %v468
        %v479 = vmul.f32 %v457, %v468
        %v480 = vmul.f32 %v458, %v468
        %v481 = vmul.f32 %v459, %v468
        %v482 = vmul.f32 %v460, %v468
        %v483 = vmul.f32 %v461, %v468
        %v484 = vmul.f32 %v462, %v468
        %v485 = vmul.f32 %v463, %v468
        %v487 = vlaneseq
        %v488 = vshrl.u32 %v487, 7
        %v489 = vsub.s32 0, %v488
        %v490 = vrot.slane %v253, %v489
        %v492 = vadd.f32 %v470, %v490
        %v493 = vadd.f32 %v471, %v490
        %v494 = vadd.f32 %v472, %v490
        %v495 = vadd.f32 %v473, %v490
        %v496 = vadd.f32 %v474, %v490
        %v497 = vadd.f32 %v475, %v490
        %v498 = vadd.f32 %v476, %v490
        %v499 = vadd.f32 %v477, %v490
        %v500 = vadd.f32 %v478, %v490
        %v501 = vadd.f32 %v479, %v490
        %v502 = vadd.f32 %v480, %v490
        %v503 = vadd.f32 %v481, %v490
        %v504 = vadd.f32 %v482, %v490
        %v505 = vadd.f32 %v483, %v490
        %v506 = vadd.f32 %v484, %v490
        %v507 = vadd.f32 %v485, %v490
        %v508 = vld [vmem:[%s3] sm:$0xf]
        %v510 = vsel %vm254, %v508, 0
        %v513 = vsel %vm254, %v492, 0
        %v516 = vsel %vm254, %v493, 0
        %v519 = vsel %vm254, %v494, 0
        %v522 = vsel %vm254, %v495, 0
        %v525 = vsel %vm254, %v496, 0
        %v528 = vsel %vm254, %v497, 0
        %v531 = vsel %vm254, %v498, 0
        %v534 = vsel %vm254, %v499, 0
        %v537 = vsel %vm254, %v500, 0
        %v540 = vsel %vm254, %v501, 0
        %v543 = vsel %vm254, %v502, 0
        %v546 = vsel %vm254, %v503, 0
        %v549 = vsel %vm254, %v504, 0
        %v552 = vsel %vm254, %v505, 0
        %v555 = vsel %vm254, %v506, 0
        %v558 = vsel %vm254, %v507, 0
        %560 = vmatprep.subr.mxu0 0.0
        %561 = vmatpush1.xpose.msra.mxu0 %v513
        %562 = vmatprep.subr.mxu0 0.0
        %563 = vmatpush1.xpose.msra.mxu0 %v516
        %564 = vmatprep.subr.mxu0 0.0
        %565 = vmatpush1.xpose.msra.mxu0 %v519
        %566 = vmatprep.subr.mxu0 0.0
        %567 = vmatpush1.xpose.msra.mxu0 %v522
        %568 = vmatprep.subr.mxu0 0.0
        %569 = vmatpush1.xpose.msra.mxu0 %v525
        %570 = vmatprep.subr.mxu0 0.0
        %571 = vmatpush1.xpose.msra.mxu0 %v528
        %572 = vmatprep.subr.mxu0 0.0
        %573 = vmatpush1.xpose.msra.mxu0 %v531
        %574 = vmatprep.subr.mxu0 0.0
        %575 = vmatpush1.xpose.msra.mxu0 %v534
        %576 = vmatprep.subr.mxu0 0.0
        %577 = vmatpush1.xpose.msra.mxu0 %v537
        %578 = vmatprep.subr.mxu0 0.0
        %579 = vmatpush1.xpose.msra.mxu0 %v540
        %580 = vmatprep.subr.mxu0 0.0
        %581 = vmatpush1.xpose.msra.mxu0 %v543
        %582 = vmatprep.subr.mxu0 0.0
        %583 = vmatpush1.xpose.msra.mxu0 %v546
        %584 = vmatprep.subr.mxu0 0.0
        %585 = vmatpush1.xpose.msra.mxu0 %v549
        %586 = vmatprep.subr.mxu0 0.0
        %587 = vmatpush1.xpose.msra.mxu0 %v552
        %588 = vmatprep.subr.mxu0 0.0
        %589 = vmatpush1.xpose.msra.mxu0 %v555
        %590 = vmatprep.subr.mxu0 0.0
        %591 = vmatpush1.xpose.msra.mxu0 %v558
        %592 = vmatprep.subr.mxu0 0.0
        %593 = vmatpush1.xpose.msra.mxu0 0.0
        %594 = vmatprep.subr.mxu0 0.0
        %595 = vmatpush1.xpose.msra.mxu0 0.0
        %596 = vmatprep.subr.mxu0 0.0
        %597 = vmatpush1.xpose.msra.mxu0 0.0
        %598 = vmatprep.subr.mxu0 0.0
        %599 = vmatpush1.xpose.msra.mxu0 0.0
        %600 = vmatprep.subr.mxu0 0.0
        %601 = vmatpush1.xpose.msra.mxu0 0.0
        %602 = vmatprep.subr.mxu0 0.0
        %603 = vmatpush1.xpose.msra.mxu0 0.0
        %604 = vmatprep.subr.mxu0 0.0
        %605 = vmatpush1.xpose.msra.mxu0 0.0
        %606 = vmatprep.subr.mxu0 0.0
        %607 = vmatpush1.xpose.msra.mxu0 0.0
        %608 = vmatprep.subr.mxu0 0.0
        %609 = vmatpush1.xpose.msra.mxu0 0.0
        %610 = vmatprep.subr.mxu0 0.0
        %611 = vmatpush1.xpose.msra.mxu0 0.0
        %612 = vmatprep.subr.mxu0 0.0
        %613 = vmatpush1.xpose.msra.mxu0 0.0
        %614 = vmatprep.subr.mxu0 0.0
        %615 = vmatpush1.xpose.msra.mxu0 0.0
        %616 = vmatprep.subr.mxu0 0.0
        %617 = vmatpush1.xpose.msra.mxu0 0.0
        %618 = vmatprep.subr.mxu0 0.0
        %619 = vmatpush1.xpose.msra.mxu0 0.0
        %620 = vmatprep.subr.mxu0 0.0
        %621 = vmatpush1.xpose.msra.mxu0 0.0
        %622 = vmatprep.subr.mxu0 0.0
        %623 = vmatpush1.xpose.msra.mxu0 0.0
        %624 = vmatprep.mubr.f32.mxu0 0.0
        %625 = vmatmul.mubr.f32.gmra.mrb[0].mxu0 %v510
        %v626 = vpop.f32.mrb[0].mxu0
        %v627 = vadd.f32 0.0, %v626
        %v628 = vpop.f32.mrb[0].mxu0
        %629 = vdwg.mxu0
        %630 = vst [vmem:[%s234] sm:$0xf] %v627
        %s631 = sand.u32 %s134, 1
        %s632 = scalar_lea.sflag [#allocation4], %s631
        %s633 = sand.u32 %s134, 1
        %s634 = smul.addr %s633, 4
        %s635 = scalar_lea.vmem [#allocation5], %s634
        // Predicated region
        $region41: #{tpu_custom_call.1} parent=35 // pred_check
          %p636 = pneg %p144
        $region42: #{tpu_custom_call.1} parent=35 // pred_check_branch
          %638 = sbr.rel (%p636) target = $region44
        $region43: #{tpu_custom_call.1} parent=35 // pred_region
          %s640 = ssub.s32 64, 64
          %641 = vsyncadd %s632, %s640
          %s642 = smul.addr %s25, 2
          %s643 = sadd.s32 %s26, %s642
          %s644 = smul.addr %s643, 64
          %s645 = scalar_lea.hbm %s4, %s644
          %s647 = sshll.u32 %s635, 4
          %s648 = int_to_ptr.vmem [resolvable:$true] %s647
          %650 = dma.vmem_to_hbm [thread:$0]  %s648, 64, %s645, %s632
        $region44: #{tpu_custom_call.1} parent=35 // pred_fallthru
          _
      $region36: #{tpu_custom_call.1} parent=5 // pred_fallthru
        _
      %p651 = scmp.le.s32.totalorder 2, %s16
      // Predicated region
      $region45: #{tpu_custom_call.1} parent=5 // pred_check
        %p652 = pneg %p651
      $region46: #{tpu_custom_call.1} parent=5 // pred_check_branch
        %654 = sbr.rel (%p652) target = $region48
      $region47: #{tpu_custom_call.1} parent=5 // pred_region
        %s655 = ssub.s32 %s16, 2
        // Predicated region
        $region49: #{tpu_custom_call.1} parent=47 // pred_check
          %p656 = pneg %p150
        $region50: #{tpu_custom_call.1} parent=47 // pred_check_branch
          %658 = sbr.rel (%p656) target = $region52
        $region51: #{tpu_custom_call.1} parent=47 // pred_region
          %s659 = sand.u32 %s135, 1
          %s660 = scalar_lea.sflag [#allocation4], %s659
          %s661 = sand.u32 %s135, 1
          %s662 = smul.addr %s661, 4
          %s663 = scalar_lea.vmem [#allocation5], %s662
          %664 = dma.done %s660, 64
        $region52: #{tpu_custom_call.1} parent=47 // pred_fallthru
          _
      $region48: #{tpu_custom_call.1} parent=5 // pred_fallthru
        _
    $region6: #{tpu_custom_call.1} parent=1 // loop_footer
      %s20 = sadd.s32 1, %s16
    $region7: #{tpu_custom_call.1} parent=1 // loop_footer_branch
      %15 = sbr.rel target = $region3
    $region8: #{tpu_custom_call.1} parent=1 // loop_exit
      _
    %665 = vsyncpa [#allocation3], 1
    %s666 = scalar_lea.sflag [#allocation3], 1
    %667 = vsyncpa %s666, 1
    %668 = vsyncpa [#allocation4], 1
    %s669 = scalar_lea.sflag [#allocation4], 1
    %670 = vsyncpa %s669, 1

</llo_original>
